<compile_context>
chip_gen: v5e
topology: v5e:2x2
jax: 0.10.0
libtpu: 0.0.40
codegen_flags: <defaults>
</compile_context>

<pallas_src>
import functools

import jax
import jax.numpy as jnp
from jax.experimental import pallas as pl
from jax.experimental.pallas import tpu as pltpu


def _round_up(n, m):
    return ((n + m - 1) // m) * m


# ----------------------------------------------------------------------------
# Kernel A: centered orthonormal 2D inverse DFT (real part), block-packed matmuls
# ----------------------------------------------------------------------------
def _idft2_real_kernel(x_ref, mwb_ref, mhr_ref, mhi_ref, o_ref):
    tb, hp, w2p = x_ref.shape
    wp = w2p // 2
    # Stage 1: single block matmul over all TB images (Hp % 8 == 0 -> the reshape is a
    # layout-preserving collapse of the leading dims).
    x2 = x_ref[...].reshape(tb * hp, w2p)
    t = jnp.dot(x2, mwb_ref[...], preferred_element_type=jnp.float32)  # [tr | ti]
    t3 = t.reshape(tb, hp, w2p)
    mhr = mhr_ref[...]
    mhi = mhi_ref[...]
    # Stage 2: left-multiplication by MH (cannot be row-batched); static unroll over TB.
    for b in range(tb):
        tr = t3[b, :, :wp]          # lane-aligned slices (Wp is a multiple of 128)
        ti = t3[b, :, wp:]
        o_ref[b] = (jnp.dot(mhr, tr, preferred_element_type=jnp.float32)
                    - jnp.dot(mhi, ti, preferred_element_type=jnp.float32)
                    ).astype(o_ref.dtype)


def _pick_tb(bc, hp, wp, cap=8, budget_bytes=12 * 1024 * 1024):
    """Largest divisor of bc (<= cap) whose double-buffered I/O fits a safe VMEM budget
    (12 MiB keeps us under v5e's 16 MiB default scoped limit; raise via
    vmem_limit_bytes on v5e/v6e for even larger tiles)."""
    best = 1
    for tb in range(1, min(cap, bc) + 1):
        if bc % tb:
            continue
        io_bytes = 4 * 2 * (tb * hp * 2 * wp + tb * hp * wp)  # dbl-buffered in + out
        if io_bytes <= budget_bytes:
            best = tb
    return best


def centered_idft2_real(xcat, mw_block, mhr, mhi):
    bc, hp, w2p = xcat.shape
    wp = w2p // 2
    tb = _pick_tb(bc, hp, wp)
    return pl.pallas_call(
        _idft2_real_kernel,
        out_shape=jax.ShapeDtypeStruct((bc, hp, wp), jnp.float32),
        grid=(bc // tb,),
        in_specs=[
            pl.BlockSpec((tb, hp, w2p), lambda b: (b, 0, 0)),
            pl.BlockSpec((w2p, w2p), lambda b: (0, 0)),   # VMEM-resident across steps
            pl.BlockSpec((hp, hp), lambda b: (0, 0)),
            pl.BlockSpec((hp, hp), lambda b: (0, 0)),
        ],
        out_specs=pl.BlockSpec((tb, hp, wp), lambda b: (b, 0, 0)),
        compiler_params=pltpu.CompilerParams(dimension_semantics=("parallel",)),
    )(xcat, mw_block, mhr, mhi)


# ----------------------------------------------------------------------------
# Kernel B: per-(batch, spatial-tile)  y/gamma -> folded IRIM cell -> head -> *gamma
# ----------------------------------------------------------------------------
def _chan_matmul(w, ys):
    # (O, C) x (C, T).  For C == 1 use a broadcast multiply instead of a K=1 MXU matmul.
    if ys.shape[0] == 1:
        return w * ys
    return jnp.dot(w, ys, preferred_element_type=jnp.float32)


def _irim_head_kernel(gamma_ref, y_ref, w1e_ref, b1_ref, wo_ref, woe_ref, bo_ref, o_ref):
    g = gamma_ref[pl.program_id(0), 0]          # scalar from SMEM
    inv_g = 1.0 / g                             # scalar reciprocal, not a vector divide
    ys = y_ref[0] * inv_g                       # (C, T)      RescaleByStd.forward
    # TODO(synk): the real IRIM `model` is an injected invertible conv-RNN consuming
    # [y, mask]; stand-in is a deterministic 1x1-conv ReLU residual cell, with the re/im
    # duplication, multiplicity copies and latent zero padding folded into w1e / woe.
    z = jnp.maximum(_chan_matmul(w1e_ref[...], ys) + b1_ref[...], 0.0)   # (NL, T)
    # TODO(synk): `output_function` is also injected; stand-in is a 1x1 conv n_latent->2.
    o = (_chan_matmul(woe_ref[...], ys)
         + jnp.dot(wo_ref[...], z, preferred_element_type=jnp.float32)
         + bo_ref[...])
    o_ref[0] = (o * g).astype(o_ref.dtype)      # RescaleByStd.reverse


def _pick_hw_tile(hw, target=16384):
    n_tiles = max(1, -(-hw // target))
    t = _round_up(-(-hw // n_tiles), 128)
    return t, n_tiles


def irim_head(y_flat, gamma, w1e, b1, wo, woe, bo, t_hw):
    b, c, hwp = y_flat.shape
    nl = wo.shape[1]
    return pl.pallas_call(
        _irim_head_kernel,
        out_shape=jax.ShapeDtypeStruct((b, 2, hwp), jnp.float32),
        grid=(b, hwp // t_hw),
        in_specs=[
            pl.BlockSpec(memory_space=pltpu.MemorySpace.SMEM),       # gamma (B, 1)
            pl.BlockSpec((1, c, t_hw), lambda i, s: (i, 0, s)),
            pl.BlockSpec((nl, c), lambda i, s: (0, 0)),
            pl.BlockSpec((nl, 1), lambda i, s: (0, 0)),
            pl.BlockSpec((2, nl), lambda i, s: (0, 0)),
            pl.BlockSpec((2, c), lambda i, s: (0, 0)),
            pl.BlockSpec((2, 1), lambda i, s: (0, 0)),
        ],
        out_specs=pl.BlockSpec((1, 2, t_hw), lambda i, s: (i, 0, s)),
        compiler_params=pltpu.CompilerParams(
            dimension_semantics=("parallel", "parallel")),
    )(gamma, y_flat, w1e, b1, wo, woe, bo)


# ----------------------------------------------------------------------------
# Glue: DFT matrices (hoisted out of jit), parameters, rescale statistics
# ----------------------------------------------------------------------------
def centered_idft_matrix(n):
    """M such that M @ v == fftshift(ifft(ifftshift(v), norm='ortho'))."""
    eye = jnp.eye(n, dtype=jnp.complex64)
    return jnp.fft.fftshift(
        jnp.fft.ifft(jnp.fft.ifftshift(eye, axes=0), axis=0, norm="ortho"), axes=0)


@functools.lru_cache(maxsize=None)
def make_dft_operands(h, w):
    """Block-packed, lane/sublane-padded centered-IDFT matrices (built once per shape)."""
    hp = _round_up(h, 8)
    wp = _round_up(w, 128)
    mh = centered_idft_matrix(h)
    mwt = centered_idft_matrix(w).T
    mhr = jnp.pad(jnp.real(mh).astype(jnp.float32), ((0, hp - h), (0, hp - h)))
    mhi = jnp.pad(jnp.imag(mh).astype(jnp.float32), ((0, hp - h), (0, hp - h)))
    mwtr = jnp.pad(jnp.real(mwt).astype(jnp.float32), ((0, wp - w), (0, wp - w)))
    mwti = jnp.pad(jnp.imag(mwt).astype(jnp.float32), ((0, wp - w), (0, wp - w)))
    mw_block = jnp.block([[mwtr, mwti], [-mwti, mwtr]])           # (2Wp, 2Wp)
    return mw_block, mhr, mhi


def make_params(n_latent):
    key = jax.random.PRNGKey(0)
    k1, k2, k3, k4 = jax.random.split(key, 4)
    w1 = 0.05 * jax.random.normal(k1, (n_latent, n_latent), jnp.float32)
    b1 = 0.05 * jax.random.normal(k2, (n_latent, 1), jnp.float32)
    wo = 0.05 * jax.random.normal(k3, (2, n_latent), jnp.float32)
    bo = 0.05 * jax.random.normal(k4, (2, 1), jnp.float32)
    return w1, b1, wo, bo


@functools.partial(jax.jit, static_argnames=("n_latent", "multiplicity", "slack"))
def irim_fastmri_forward(ksp_y, mask_c, params, dft_ops,
                         n_latent=32, multiplicity=1, slack=1e-6):
    B, C, H, W = ksp_y.shape
    assert 2 * C * multiplicity <= n_latent
    w1, b1, wo, bo = params
    mw_block, mhr, mhi = dft_ops
    Hp = mhr.shape[0]
    Wp = mw_block.shape[0] // 2

    # from_space: centered ortho IFFT2 over dims (2, 3), real part  -> Pallas kernel A
    pad = ((0, 0), (0, 0), (0, Hp - H), (0, Wp - W))
    xr = jnp.pad(jnp.real(ksp_y).astype(jnp.float32), pad)
    xi = jnp.pad(jnp.imag(ksp_y).astype(jnp.float32), pad)
    xcat = jnp.concatenate([xr, xi], axis=-1).reshape(B * C, Hp, 2 * Wp)
    y_pad = centered_idft2_real(xcat, mw_block, mhr, mhi)          # (B*C, Hp, Wp)
    y_real = y_pad[:, :H, :W].reshape(B, C, H, W)

    # TODO(synk): mask_c (mask_c[:, :, 1][None, ..., None]) feeds the injected IRIM
    # model's data-consistency term; the stand-in cell does not consume it.

    # RescaleByStd.forward statistics: std(ddof=1) of the (..., 2)-duplicated center
    # crop, computed from a single copy (each element appears twice -> 2*ss / (2N-1)).
    Hc, Wc = min(256, H), min(256, W)
    h0, w0 = (H - Hc) // 2, (W - Wc) // 2
    crop = y_real[:, :, h0:h0 + Hc, w0:w0 + Wc].reshape(B, -1)
    n = crop.shape[1]
    mean = jnp.mean(crop, axis=1, keepdims=True)
    ss = jnp.sum(jnp.square(crop - mean), axis=1)
    gamma = jnp.sqrt(2.0 * ss / (2 * n - 1)) + slack               # (B,)

    # Latent construction folded into effective weights (re/im duplication, multiplicity
    # copies, zero padding) — the padded (B, n_latent, HW) state is never materialized.
    cm2 = 2 * C * multiplicity
    w1e = w1[:, :cm2].reshape(n_latent, multiplicity, C, 2).sum(axis=(1, 3))  # (NL, C)
    woe = wo[:, :cm2].reshape(2, multiplicity, C, 2).sum(axis=(1, 3))         # (2, C)

    hw = H * W
    t_hw, n_tiles = _pick_hw_tile(hw)
    hwp = t_hw * n_tiles
    y_flat = y_real.reshape(B, C, hw)
    if hwp != hw:
        y_flat = jnp.pad(y_flat, ((0, 0), (0, 0), (0, hwp - hw)))

    # model + output_function + RescaleByStd.reverse  -> Pallas kernel B
    out = irim_head(y_flat, gamma.reshape(B, 1), w1e, b1, wo, woe, bo, t_hw)
    out = out[:, :, :hw].reshape(B, 2, H, W)

    # real_to_complex: (B, 2, H, W) -> (B, 1, H, W, 2)
    return jnp.stack([out[:, 0], out[:, 1]], axis=-1)[:, None]


def reference_forward(ksp_y, params, n_latent=32, multiplicity=1, slack=1e-6):
    """Pure-JAX reference mirroring the same math (uses jnp.fft)."""
    B, C, H, W = ksp_y.shape
    w1, b1, wo, bo = params
    y = jnp.real(jnp.fft.fftshift(
        jnp.fft.ifft2(jnp.fft.ifftshift(ksp_y, axes=(2, 3)), axes=(2, 3), norm="ortho"),
        axes=(2, 3))).astype(jnp.float32)
    y5 = jnp.repeat(y[..., None], 2, axis=-1)
    Hc, Wc = min(256, H), min(256, W)
    h0, w0 = (H - Hc) // 2, (W - Wc) // 2
    crop = y5[:, :, h0:h0 + Hc, w0:w0 + Wc, :]
    gamma = jnp.std(crop.reshape(B, -1), axis=1, ddof=1) + slack
    y5 = y5 / gamma[:, None, None, None, None]
    y5 = jnp.concatenate([y5] * multiplicity, axis=1)
    Cm = y5.shape[1]
    eta = jnp.transpose(y5, (0, 1, 4, 2, 3)).reshape(B, 2 * Cm, H, W)
    x = jnp.concatenate(
        [eta, jnp.zeros((B, n_latent - 2 * Cm, H, W), jnp.float32)], axis=1)
    xf = x.reshape(B, n_latent, H * W)
    h = jnp.einsum("ij,bjk->bik", w1, xf) + b1[None]
    h = xf + jnp.maximum(h, 0.0)
    o = jnp.einsum("ij,bjk->bik", wo, h) + bo[None]
    o = o.reshape(B, 2, H, W)
    eta_c = jnp.stack([o[:, 0], o[:, 1]], axis=-1)[:, None]
    return eta_c * gamma[:, None, None, None, None]


if __name__ == "__main__":
    B, C, H, W = 2, 1, 16, 16
    n_latent, multiplicity = 32, 1

    key = jax.random.PRNGKey(0)
    ka, kb, km = jax.random.split(key, 3)
    ksp_y = (jax.random.normal(ka, (B, C, H, W), jnp.float32)
             + 1j * jax.random.normal(kb, (B, C, H, W), jnp.float32)).astype(jnp.complex64)
    mask_c = (jax.random.uniform(km, (C, H, 2, W)) > 0.5).astype(jnp.float32)

    params = make_params(n_latent)
    dft_ops = make_dft_operands(H, W)

    out = irim_fastmri_forward(ksp_y, mask_c, params, dft_ops,
                               n_latent=n_latent, multiplicity=multiplicity)
    out = jax.block_until_ready(out)

    ref = reference_forward(ksp_y, params, n_latent=n_latent, multiplicity=multiplicity)
    assert out.shape == (B, 1, H, W, 2), out.shape
    assert jnp.allclose(out, ref, rtol=5e-3, atol=5e-3), float(jnp.max(jnp.abs(out - ref)))

    print("KERNEL_OK")
</pallas_src>

<mosaic_0001>
module attributes {stable_mosaic.version = 11 : i64} {
  func.func @_idft2_real_kernel(%arg0: i32, %arg1: memref<2x16x256xf32, #tpu.memory_space<vmem>>, %arg2: memref<256x256xf32, #tpu.memory_space<vmem>>, %arg3: memref<16x16xf32, #tpu.memory_space<vmem>>, %arg4: memref<16x16xf32, #tpu.memory_space<vmem>>, %arg5: memref<2x16x128xf32, #tpu.memory_space<vmem>>) attributes {dimension_semantics = [#tpu.dimension_semantics<parallel>], iteration_bounds = array<i64: 1>, scalar_prefetch = 0 : i64, scratch_operands = 0 : i64, tpu.core_type = #tpu.core_type<tc>, window_params = [{transform_indices = @transform_0, window_bounds = array<i64: 2, 16, 256>}, {pipeline_mode = #tpu.pipeline_mode<synchronous>, transform_indices = @transform_1, window_bounds = array<i64: 256, 256>}, {pipeline_mode = #tpu.pipeline_mode<synchronous>, transform_indices = @transform_2, window_bounds = array<i64: 16, 16>}, {pipeline_mode = #tpu.pipeline_mode<synchronous>, transform_indices = @transform_3, window_bounds = array<i64: 16, 16>}, {transform_indices = @transform_4, window_bounds = array<i64: 2, 16, 128>}]} {
    %c0 = arith.constant 0 : index
    %c0_0 = arith.constant 0 : index
    %c0_1 = arith.constant 0 : index
    %0 = vector.load %arg1[%c0, %c0_0, %c0_1] : memref<2x16x256xf32, #tpu.memory_space<vmem>>, vector<2x16x256xf32>
    %1 = vector.shape_cast %0 : vector<2x16x256xf32> to vector<32x256xf32>
    %c0_2 = arith.constant 0 : index
    %c0_3 = arith.constant 0 : index
    %2 = vector.load %arg2[%c0_2, %c0_3] : memref<256x256xf32, #tpu.memory_space<vmem>>, vector<256x256xf32>
    %cst = arith.constant dense<0.000000e+00> : vector<32x256xf32>
    %3 = tpu.matmul %1, %2, %cst {dimension_numbers = #tpu.dot_dimension_numbers<[1], [0], [0], [1], [0, 0, 1, 1], [], []>} : vector<32x256xf32>, vector<256x256xf32>, vector<32x256xf32> -> vector<32x256xf32>
    %4 = vector.shape_cast %3 : vector<32x256xf32> to vector<2x16x256xf32>
    %c0_4 = arith.constant 0 : index
    %c0_5 = arith.constant 0 : index
    %5 = vector.load %arg3[%c0_4, %c0_5] : memref<16x16xf32, #tpu.memory_space<vmem>>, vector<16x16xf32>
    %c0_6 = arith.constant 0 : index
    %c0_7 = arith.constant 0 : index
    %6 = vector.load %arg4[%c0_6, %c0_7] : memref<16x16xf32, #tpu.memory_space<vmem>>, vector<16x16xf32>
    %7 = vector.extract_strided_slice %4 {offsets = [0, 0, 0], sizes = [1, 16, 128], strides = [1, 1, 1]} : vector<2x16x256xf32> to vector<1x16x128xf32>
    %8 = vector.shape_cast %7 : vector<1x16x128xf32> to vector<16x128xf32>
    %9 = vector.extract_strided_slice %4 {offsets = [0, 0, 128], sizes = [1, 16, 128], strides = [1, 1, 1]} : vector<2x16x256xf32> to vector<1x16x128xf32>
    %10 = vector.shape_cast %9 : vector<1x16x128xf32> to vector<16x128xf32>
    %cst_8 = arith.constant dense<0.000000e+00> : vector<16x128xf32>
    %11 = tpu.matmul %5, %8, %cst_8 {dimension_numbers = #tpu.dot_dimension_numbers<[1], [0], [0], [1], [0, 0, 1, 1], [], []>} : vector<16x16xf32>, vector<16x128xf32>, vector<16x128xf32> -> vector<16x128xf32>
    %cst_9 = arith.constant dense<0.000000e+00> : vector<16x128xf32>
    %12 = tpu.matmul %6, %10, %cst_9 {dimension_numbers = #tpu.dot_dimension_numbers<[1], [0], [0], [1], [0, 0, 1, 1], [], []>} : vector<16x16xf32>, vector<16x128xf32>, vector<16x128xf32> -> vector<16x128xf32>
    %13 = arith.subf %11, %12 : vector<16x128xf32>
    %c0_10 = arith.constant 0 : index
    %c0_11 = arith.constant 0 : index
    %c0_12 = arith.constant 0 : index
    %14 = vector.load %arg5[%c0_10, %c0_11, %c0_12] : memref<2x16x128xf32, #tpu.memory_space<vmem>>, vector<1x16x128xf32>
    %15 = vector.shape_cast %14 : vector<1x16x128xf32> to vector<16x128xf32>
    %16 = vector.shape_cast %13 : vector<16x128xf32> to vector<1x16x128xf32>
    tpu.vector_store %arg5[%c0_10, %c0_11, %c0_12], %16 {strides = array<i32>} : memref<2x16x128xf32, #tpu.memory_space<vmem>>, vector<1x16x128xf32>,
    %17 = vector.extract_strided_slice %4 {offsets = [1, 0, 0], sizes = [1, 16, 128], strides = [1, 1, 1]} : vector<2x16x256xf32> to vector<1x16x128xf32>
    %18 = vector.shape_cast %17 : vector<1x16x128xf32> to vector<16x128xf32>
    %19 = vector.extract_strided_slice %4 {offsets = [1, 0, 128], sizes = [1, 16, 128], strides = [1, 1, 1]} : vector<2x16x256xf32> to vector<1x16x128xf32>
    %20 = vector.shape_cast %19 : vector<1x16x128xf32> to vector<16x128xf32>
    %cst_13 = arith.constant dense<0.000000e+00> : vector<16x128xf32>
    %21 = tpu.matmul %5, %18, %cst_13 {dimension_numbers = #tpu.dot_dimension_numbers<[1], [0], [0], [1], [0, 0, 1, 1], [], []>} : vector<16x16xf32>, vector<16x128xf32>, vector<16x128xf32> -> vector<16x128xf32>
    %cst_14 = arith.constant dense<0.000000e+00> : vector<16x128xf32>
    %22 = tpu.matmul %6, %20, %cst_14 {dimension_numbers = #tpu.dot_dimension_numbers<[1], [0], [0], [1], [0, 0, 1, 1], [], []>} : vector<16x16xf32>, vector<16x128xf32>, vector<16x128xf32> -> vector<16x128xf32>
    %23 = arith.subf %21, %22 : vector<16x128xf32>
    %c1 = arith.constant 1 : index
    %c0_15 = arith.constant 0 : index
    %c0_16 = arith.constant 0 : index
    %24 = vector.load %arg5[%c1, %c0_15, %c0_16] : memref<2x16x128xf32, #tpu.memory_space<vmem>>, vector<1x16x128xf32>
    %25 = vector.shape_cast %24 : vector<1x16x128xf32> to vector<16x128xf32>
    %26 = vector.shape_cast %23 : vector<16x128xf32> to vector<1x16x128xf32>
    tpu.vector_store %arg5[%c1, %c0_15, %c0_16], %26 {strides = array<i32>} : memref<2x16x128xf32, #tpu.memory_space<vmem>>, vector<1x16x128xf32>,
    return
  }
  func.func @transform_0(%arg0: i32) -> (i32, i32, i32) {
    %c0_i32 = arith.constant 0 : i32
    %c0_i32_0 = arith.constant 0 : i32
    %c0_i32_1 = arith.constant 0 : i32
    return %arg0, %c0_i32, %c0_i32_0 : i32, i32, i32
  }
  func.func @transform_1(%arg0: i32) -> (i32, i32) {
    %c0_i32 = arith.constant 0 : i32
    %c0_i32_0 = arith.constant 0 : i32
    %c0_i32_1 = arith.constant 0 : i32
    return %c0_i32, %c0_i32_0 : i32, i32
  }
  func.func @transform_2(%arg0: i32) -> (i32, i32) {
    %c0_i32 = arith.constant 0 : i32
    %c0_i32_0 = arith.constant 0 : i32
    %c0_i32_1 = arith.constant 0 : i32
    return %c0_i32, %c0_i32_0 : i32, i32
  }
  func.func @transform_3(%arg0: i32) -> (i32, i32) {
    %c0_i32 = arith.constant 0 : i32
    %c0_i32_0 = arith.constant 0 : i32
    %c0_i32_1 = arith.constant 0 : i32
    return %c0_i32, %c0_i32_0 : i32, i32
  }
  func.func @transform_4(%arg0: i32) -> (i32, i32, i32) {
    %c0_i32 = arith.constant 0 : i32
    %c0_i32_0 = arith.constant 0 : i32
    %c0_i32_1 = arith.constant 0 : i32
    return %arg0, %c0_i32, %c0_i32_0 : i32, i32, i32
  }
}

module attributes {stable_mosaic.version = 11 : i64} {
  func.func @_irim_head_kernel(%arg0: i32, %arg1: i32, %arg2: memref<2x1xf32, #tpu.memory_space<smem>>, %arg3: memref<1x1x256xf32, #tpu.memory_space<vmem>>, %arg4: memref<32x1xf32, #tpu.memory_space<vmem>>, %arg5: memref<32x1xf32, #tpu.memory_space<vmem>>, %arg6: memref<2x32xf32, #tpu.memory_space<vmem>>, %arg7: memref<2x1xf32, #tpu.memory_space<vmem>>, %arg8: memref<2x1xf32, #tpu.memory_space<vmem>>, %arg9: memref<1x2x256xf32, #tpu.memory_space<vmem>>) attributes {dimension_semantics = [#tpu.dimension_semantics<parallel>, #tpu.dimension_semantics<parallel>], iteration_bounds = array<i64: 2, 1>, scalar_prefetch = 0 : i64, scratch_operands = 0 : i64, tpu.core_type = #tpu.core_type<tc>, window_params = [{transform_indices = @transform_0, window_bounds = array<i64: 2, 1>}, {transform_indices = @transform_1, window_bounds = array<i64: 1, 1, 256>}, {pipeline_mode = #tpu.pipeline_mode<synchronous>, transform_indices = @transform_2, window_bounds = array<i64: 32, 1>}, {pipeline_mode = #tpu.pipeline_mode<synchronous>, transform_indices = @transform_3, window_bounds = array<i64: 32, 1>}, {pipeline_mode = #tpu.pipeline_mode<synchronous>, transform_indices = @transform_4, window_bounds = array<i64: 2, 32>}, {pipeline_mode = #tpu.pipeline_mode<synchronous>, transform_indices = @transform_5, window_bounds = array<i64: 2, 1>}, {pipeline_mode = #tpu.pipeline_mode<synchronous>, transform_indices = @transform_6, window_bounds = array<i64: 2, 1>}, {transform_indices = @transform_7, window_bounds = array<i64: 1, 2, 256>}]} {
    %0 = arith.index_cast %arg0 : i32 to index
    %c0 = arith.constant 0 : index
    %1 = memref.load %arg2[%0, %c0] : memref<2x1xf32, #tpu.memory_space<smem>>
    %cst = arith.constant 1.000000e+00 : f32
    %2 = arith.divf %cst, %1 : f32
    %c0_0 = arith.constant 0 : index
    %c0_1 = arith.constant 0 : index
    %c0_2 = arith.constant 0 : index
    %3 = vector.load %arg3[%c0_0, %c0_1, %c0_2] : memref<1x1x256xf32, #tpu.memory_space<vmem>>, vector<1x1x256xf32>
    %4 = vector.shape_cast %3 : vector<1x1x256xf32> to vector<1x256xf32>
    %5 = vector.broadcast %2 : f32 to vector<1x256xf32>
    %6 = arith.mulf %4, %5 : vector<1x256xf32>
    %c0_3 = arith.constant 0 : index
    %c0_4 = arith.constant 0 : index
    %7 = vector.load %arg4[%c0_3, %c0_4] : memref<32x1xf32, #tpu.memory_space<vmem>>, vector<32x1xf32>
    %8 = vector.broadcast %7 : vector<32x1xf32> to vector<32x256xf32>
    %9 = vector.broadcast %6 : vector<1x256xf32> to vector<32x256xf32>
    %10 = arith.mulf %8, %9 : vector<32x256xf32>
    %c0_5 = arith.constant 0 : index
    %c0_6 = arith.constant 0 : index
    %11 = vector.load %arg5[%c0_5, %c0_6] : memref<32x1xf32, #tpu.memory_space<vmem>>, vector<32x1xf32>
    %12 = vector.broadcast %11 : vector<32x1xf32> to vector<32x256xf32>
    %13 = arith.addf %10, %12 : vector<32x256xf32>
    %cst_7 = arith.constant 0.000000e+00 : f32
    %14 = vector.broadcast %cst_7 : f32 to vector<32x256xf32>
    %15 = arith.maximumf %13, %14 : vector<32x256xf32>
    %c0_8 = arith.constant 0 : index
    %c0_9 = arith.constant 0 : index
    %16 = vector.load %arg7[%c0_8, %c0_9] : memref<2x1xf32, #tpu.memory_space<vmem>>, vector<2x1xf32>
    %17 = vector.broadcast %16 : vector<2x1xf32> to vector<2x256xf32>
    %18 = vector.broadcast %6 : vector<1x256xf32> to vector<2x256xf32>
    %19 = arith.mulf %17, %18 : vector<2x256xf32>
    %c0_10 = arith.constant 0 : index
    %c0_11 = arith.constant 0 : index
    %20 = vector.load %arg6[%c0_10, %c0_11] : memref<2x32xf32, #tpu.memory_space<vmem>>, vector<2x32xf32>
    %cst_12 = arith.constant dense<0.000000e+00> : vector<2x256xf32>
    %21 = tpu.matmul %20, %15, %cst_12 {dimension_numbers = #tpu.dot_dimension_numbers<[1], [0], [0], [1], [0, 0, 1, 1], [], []>} : vector<2x32xf32>, vector<32x256xf32>, vector<2x256xf32> -> vector<2x256xf32>
    %22 = arith.addf %19, %21 : vector<2x256xf32>
    %c0_13 = arith.constant 0 : index
    %c0_14 = arith.constant 0 : index
    %23 = vector.load %arg8[%c0_13, %c0_14] : memref<2x1xf32, #tpu.memory_space<vmem>>, vector<2x1xf32>
    %24 = vector.broadcast %23 : vector<2x1xf32> to vector<2x256xf32>
    %25 = arith.addf %22, %24 : vector<2x256xf32>
    %26 = vector.broadcast %1 : f32 to vector<2x256xf32>
    %27 = arith.mulf %25, %26 : vector<2x256xf32>
    %c0_15 = arith.constant 0 : index
    %c0_16 = arith.constant 0 : index
    %c0_17 = arith.constant 0 : index
    %28 = vector.load %arg9[%c0_15, %c0_16, %c0_17] : memref<1x2x256xf32, #tpu.memory_space<vmem>>, vector<1x2x256xf32>
    %29 = vector.shape_cast %28 : vector<1x2x256xf32> to vector<2x256xf32>
    %30 = vector.shape_cast %27 : vector<2x256xf32> to vector<1x2x256xf32>
    tpu.vector_store %arg9[%c0_15, %c0_16, %c0_17], %30 {strides = array<i32>} : memref<1x2x256xf32, #tpu.memory_space<vmem>>, vector<1x2x256xf32>,
    return
  }
  func.func @transform_0(%arg0: i32, %arg1: i32) -> (i32, i32) {
    %c0_i32 = arith.constant 0 : i32
    %c0_i32_0 = arith.constant 0 : i32
    %c0_i32_1 = arith.constant 0 : i32
    return %c0_i32, %c0_i32_0 : i32, i32
  }
  func.func @transform_1(%arg0: i32, %arg1: i32) -> (i32, i32, i32) {
    %c0_i32 = arith.constant 0 : i32
    %c0_i32_0 = arith.constant 0 : i32
    return %arg0, %c0_i32, %arg1 : i32, i32, i32
  }
  func.func @transform_2(%arg0: i32, %arg1: i32) -> (i32, i32) {
    %c0_i32 = arith.constant 0 : i32
    %c0_i32_0 = arith.constant 0 : i32
    %c0_i32_1 = arith.constant 0 : i32
    return %c0_i32, %c0_i32_0 : i32, i32
  }
  func.func @transform_3(%arg0: i32, %arg1: i32) -> (i32, i32) {
    %c0_i32 = arith.constant 0 : i32
    %c0_i32_0 = arith.constant 0 : i32
    %c0_i32_1 = arith.constant 0 : i32
    return %c0_i32, %c0_i32_0 : i32, i32
  }
  func.func @transform_4(%arg0: i32, %arg1: i32) -> (i32, i32) {
    %c0_i32 = arith.constant 0 : i32
    %c0_i32_0 = arith.constant 0 : i32
    %c0_i32_1 = arith.constant 0 : i32
    return %c0_i32, %c0_i32_0 : i32, i32
  }
  func.func @transform_5(%arg0: i32, %arg1: i32) -> (i32, i32) {
    %c0_i32 = arith.constant 0 : i32
    %c0_i32_0 = arith.constant 0 : i32
    %c0_i32_1 = arith.constant 0 : i32
    return %c0_i32, %c0_i32_0 : i32, i32
  }
  func.func @transform_6(%arg0: i32, %arg1: i32) -> (i32, i32) {
    %c0_i32 = arith.constant 0 : i32
    %c0_i32_0 = arith.constant 0 : i32
    %c0_i32_1 = arith.constant 0 : i32
    return %c0_i32, %c0_i32_0 : i32, i32
  }
  func.func @transform_7(%arg0: i32, %arg1: i32) -> (i32, i32, i32) {
    %c0_i32 = arith.constant 0 : i32
    %c0_i32_0 = arith.constant 0 : i32
    return %arg0, %c0_i32, %arg1 : i32, i32, i32
  }
}

</mosaic_0001>

<llo_original>
// kernel: custom-call.1
$region0: #{custom-call.1}
  %s0 = inlined_call_operand.hbm [shape: c64[2,1,16,16], index: 0, kind: input, shape index: {}]
  %s1 = inlined_call_operand.vmem [shape: f32[2,1,16,16], index: 1, kind: output, shape index: {}]
  %s2 = scalar_lea.hbm %s0, 32
  $region1: #{custom-call.1} parent=0
    #allocation0 [shape = 's32[1]{0}', space=sflag, size = 0x4, scoped, tag = 'scoped memory for custom-call.1']
    %3 = vsyncpa [#allocation0], 0
    %s5 = sshll.u32 %s2, 4
    %s6 = int_to_ptr.hbm [resolvable:$true] %s5
    %s7 = sshll.u32 %s1, 4
    %s8 = int_to_ptr.vmem [resolvable:$true] %s7
    %10 = dma.hbm_to_vmem [thread:$0]  %s6, 512, %s8, [#allocation0]
    %12 = dma.done [#allocation0], 512
    %13 = vsyncpa [#allocation0], 1

// kernel: custom-call
$region0: #{custom-call}
  %s0 = inlined_call_operand.hbm [shape: c64[2,1,16,16], index: 0, kind: input, shape index: {}]
  %s1 = inlined_call_operand.vmem [shape: f32[2,1,16,16], index: 1, kind: output, shape index: {}]
  $region1: #{custom-call} parent=0
    #allocation0 [shape = 's32[1]{0}', space=sflag, size = 0x4, scoped, tag = 'scoped memory for custom-call']
    %2 = vsyncpa [#allocation0], 0
    %s4 = sshll.u32 %s0, 4
    %s5 = int_to_ptr.hbm [resolvable:$true] %s4
    %s6 = sshll.u32 %s1, 4
    %s7 = int_to_ptr.vmem [resolvable:$true] %s6
    %9 = dma.hbm_to_vmem [thread:$0]  %s5, 512, %s7, [#allocation0]
    %11 = dma.done [#allocation0], 512
    %12 = vsyncpa [#allocation0], 1

// kernel: irim_fastmri_forward.2
$region0: #{irim_fastmri_forward.2}
  #allocation0 [shape = 'u32[]', space=smem, size = 0x4, offset = 0x4, fixed_abs, tag = 'smem constant byte address 0x4 - core index']
  #allocation1 [shape = 'u32[72,128]{1,0:T(1,128)}', space=vmem, size = 0x9000, scoped, tag = 'internal scratch']
  %s0 = inlined_call_operand.vmem [shape: f32[2,16,256], index: 0, kind: input, shape index: {}]
  %s1 = inlined_call_operand.hbm [shape: f32[256,256], index: 1, kind: input, shape index: {}]
  %s2 = inlined_call_operand.vmem [shape: f32[16,16], index: 2, kind: input, shape index: {}]
  %s3 = inlined_call_operand.vmem [shape: f32[16,16], index: 3, kind: input, shape index: {}]
  %s4 = inlined_call_operand.vmem [shape: f32[2,16,128], index: 4, kind: output, shape index: {}]
  %s5 = sld [smem:[#allocation0]]
  $region30: #{irim_fastmri_forward.2} parent=0
    _
  %s7 = ssub.s32 1, %s5
  %s8 = scalar_select 0, %s7, %s5
  $region1: #{irim_fastmri_forward.2} parent=0
    #allocation2 [shape = 'u8[262144]{0}', space=vmem, size = 0x40000, scoped, tag = 'input window, operand 1, single buffered']
    #allocation3 [shape = 's32[1]{0}', space=sflag, size = 0x4, scoped, tag = 'scoped memory for irim_fastmri_forward.2']
    %9 = vsyncpa [#allocation3], 0
    // Predicated region
    $region2: #{irim_fastmri_forward.2} parent=1 // pred_check
      _
    $region3: #{irim_fastmri_forward.2} parent=1 // pred_check_branch
      %11 = sbr.rel (0) target = $region5
    $region4: #{irim_fastmri_forward.2} parent=1 // pred_region
      _
    $region5: #{irim_fastmri_forward.2} parent=1 // pred_fallthru
      _
    // Predicated region
    $region6: #{irim_fastmri_forward.2} parent=1 // pred_check
      _
    $region7: #{irim_fastmri_forward.2} parent=1 // pred_check_branch
      %13 = sbr.rel (0) target = $region9
    $region8: #{irim_fastmri_forward.2} parent=1 // pred_region
      %15 = vsyncadd [#allocation3], 0
      %s16 = sshll.u32 %s1, 4
      %s17 = int_to_ptr.hbm [resolvable:$true] %s16
      %s18 = sshll.u32 [#allocation2], 4
      %s19 = int_to_ptr.vmem [resolvable:$true] %s18
      %24 = dma.hbm_to_vmem [thread:$0]  %s17, 8192, %s19, [#allocation3], 256, 256, 16
    $region9: #{irim_fastmri_forward.2} parent=1 // pred_fallthru
      _
    // Predicated region
    $region10: #{irim_fastmri_forward.2} parent=1 // pred_check
      _
    $region11: #{irim_fastmri_forward.2} parent=1 // pred_check_branch
      %26 = sbr.rel (0) target = $region13
    $region12: #{irim_fastmri_forward.2} parent=1 // pred_region
      _
    $region13: #{irim_fastmri_forward.2} parent=1 // pred_fallthru
      _
    // Predicated region
    $region14: #{irim_fastmri_forward.2} parent=1 // pred_check
      _
    $region15: #{irim_fastmri_forward.2} parent=1 // pred_check_branch
      %28 = sbr.rel (0) target = $region17
    $region16: #{irim_fastmri_forward.2} parent=1 // pred_region
      _
    $region17: #{irim_fastmri_forward.2} parent=1 // pred_fallthru
      _
    // Predicated region
    $region18: #{irim_fastmri_forward.2} parent=1 // pred_check
      _
    $region19: #{irim_fastmri_forward.2} parent=1 // pred_check_branch
      %30 = sbr.rel (0) target = $region21
    $region20: #{irim_fastmri_forward.2} parent=1 // pred_region
      %32 = dma.done [#allocation3], 8192
    $region21: #{irim_fastmri_forward.2} parent=1 // pred_fallthru
      _
    %v33 = vld [vmem:[%s0] sm:$0xff]
    %v34 = vld [vmem:[%s0 + $0x8] sm:$0xff]
    %v35 = vld [vmem:[%s0 + $0x10] sm:$0xff]
    %v36 = vld [vmem:[%s0 + $0x18] sm:$0xff]
    %v37 = vld [vmem:[%s0 + $0x20] sm:$0xff]
    %v38 = vld [vmem:[%s0 + $0x28] sm:$0xff]
    %v39 = vld [vmem:[%s0 + $0x30] sm:$0xff]
    %v40 = vld [vmem:[%s0 + $0x38] sm:$0xff]
    %v41 = vld [vmem:[#allocation2] sm:$0xff]
    %v42 = vld [vmem:[#allocation2 + $0x8] sm:$0xff]
    %v43 = vld [vmem:[#allocation2 + $0x10] sm:$0xff]
    %v44 = vld [vmem:[#allocation2 + $0x18] sm:$0xff]
    %v45 = vld [vmem:[#allocation2 + $0x20] sm:$0xff]
    %v46 = vld [vmem:[#allocation2 + $0x28] sm:$0xff]
    %v47 = vld [vmem:[#allocation2 + $0x30] sm:$0xff]
    %v48 = vld [vmem:[#allocation2 + $0x38] sm:$0xff]
    %v49 = vld [vmem:[#allocation2 + $0x40] sm:$0xff]
    %v50 = vld [vmem:[#allocation2 + $0x48] sm:$0xff]
    %v51 = vld [vmem:[#allocation2 + $0x50] sm:$0xff]
    %v52 = vld [vmem:[#allocation2 + $0x58] sm:$0xff]
    %v53 = vld [vmem:[#allocation2 + $0x60] sm:$0xff]
    %v54 = vld [vmem:[#allocation2 + $0x68] sm:$0xff]
    %v55 = vld [vmem:[#allocation2 + $0x70] sm:$0xff]
    %v56 = vld [vmem:[#allocation2 + $0x78] sm:$0xff]
    %v57 = vld [vmem:[#allocation2 + $0x80] sm:$0xff]
    %v58 = vld [vmem:[#allocation2 + $0x88] sm:$0xff]
    %v59 = vld [vmem:[#allocation2 + $0x90] sm:$0xff]
    %v60 = vld [vmem:[#allocation2 + $0x98] sm:$0xff]
    %v61 = vld [vmem:[#allocation2 + $0xa0] sm:$0xff]
    %v62 = vld [vmem:[#allocation2 + $0xa8] sm:$0xff]
    %v63 = vld [vmem:[#allocation2 + $0xb0] sm:$0xff]
    %v64 = vld [vmem:[#allocation2 + $0xb8] sm:$0xff]
    %v65 = vld [vmem:[#allocation2 + $0xc0] sm:$0xff]
    %v66 = vld [vmem:[#allocation2 + $0xc8] sm:$0xff]
    %v67 = vld [vmem:[#allocation2 + $0xd0] sm:$0xff]
    %v68 = vld [vmem:[#allocation2 + $0xd8] sm:$0xff]
    %v69 = vld [vmem:[#allocation2 + $0xe0] sm:$0xff]
    %v70 = vld [vmem:[#allocation2 + $0xe8] sm:$0xff]
    %v71 = vld [vmem:[#allocation2 + $0xf0] sm:$0xff]
    %v72 = vld [vmem:[#allocation2 + $0xf8] sm:$0xff]
    %v73 = vld [vmem:[#allocation2 + $0x100] sm:$0xff]
    %v74 = vld [vmem:[#allocation2 + $0x108] sm:$0xff]
    %v75 = vld [vmem:[#allocation2 + $0x110] sm:$0xff]
    %v76 = vld [vmem:[#allocation2 + $0x118] sm:$0xff]
    %v77 = vld [vmem:[#allocation2 + $0x120] sm:$0xff]
    %v78 = vld [vmem:[#allocation2 + $0x128] sm:$0xff]
    %v79 = vld [vmem:[#allocation2 + $0x130] sm:$0xff]
    %v80 = vld [vmem:[#allocation2 + $0x138] sm:$0xff]
    %v81 = vld [vmem:[#allocation2 + $0x140] sm:$0xff]
    %v82 = vld [vmem:[#allocation2 + $0x148] sm:$0xff]
    %v83 = vld [vmem:[#allocation2 + $0x150] sm:$0xff]
    %v84 = vld [vmem:[#allocation2 + $0x158] sm:$0xff]
    %v85 = vld [vmem:[#allocation2 + $0x160] sm:$0xff]
    %v86 = vld [vmem:[#allocation2 + $0x168] sm:$0xff]
    %v87 = vld [vmem:[#allocation2 + $0x170] sm:$0xff]
    %v88 = vld [vmem:[#allocation2 + $0x178] sm:$0xff]
    %v89 = vld [vmem:[#allocation2 + $0x180] sm:$0xff]
    %v90 = vld [vmem:[#allocation2 + $0x188] sm:$0xff]
    %v91 = vld [vmem:[#allocation2 + $0x190] sm:$0xff]
    %v92 = vld [vmem:[#allocation2 + $0x198] sm:$0xff]
    %v93 = vld [vmem:[#allocation2 + $0x1a0] sm:$0xff]
    %v94 = vld [vmem:[#allocation2 + $0x1a8] sm:$0xff]
    %v95 = vld [vmem:[#allocation2 + $0x1b0] sm:$0xff]
    %v96 = vld [vmem:[#allocation2 + $0x1b8] sm:$0xff]
    %v97 = vld [vmem:[#allocation2 + $0x1c0] sm:$0xff]
    %v98 = vld [vmem:[#allocation2 + $0x1c8] sm:$0xff]
    %v99 = vld [vmem:[#allocation2 + $0x1d0] sm:$0xff]
    %v100 = vld [vmem:[#allocation2 + $0x1d8] sm:$0xff]
    %v101 = vld [vmem:[#allocation2 + $0x1e0] sm:$0xff]
    %v102 = vld [vmem:[#allocation2 + $0x1e8] sm:$0xff]
    %v103 = vld [vmem:[#allocation2 + $0x1f0] sm:$0xff]
    %v104 = vld [vmem:[#allocation2 + $0x1f8] sm:$0xff]
    %105 = vmatpush.msra.mxu0 %v71
    %106 = vmatpush.msra.mxu0 %v69
    %107 = vmatpush.msra.mxu0 %v67
    %108 = vmatpush.msra.mxu0 %v65
    %109 = vmatpush.msra.mxu0 %v63
    %110 = vmatpush.msra.mxu0 %v61
    %111 = vmatpush.msra.mxu0 %v59
    %112 = vmatpush.msra.mxu0 %v57
    %113 = vmatpush.msra.mxu0 %v55
    %114 = vmatpush.msra.mxu0 %v53
    %115 = vmatpush.msra.mxu0 %v51
    %116 = vmatpush.msra.mxu0 %v49
    %117 = vmatpush.msra.mxu0 %v47
    %118 = vmatpush.msra.mxu0 %v45
    %119 = vmatpush.msra.mxu0 %v43
    %120 = vmatpush.msra.mxu0 %v41
    %121 = vmatmul.f32.gmra.mxu0 %v33
    %v122 = vpop.f32.mrf.mxu0
    %v123 = vadd.f32 0.0, %v122
    %124 = vmatmul.f32.gmra.mxu0 %v35
    %v125 = vpop.f32.mrf.mxu0
    %v126 = vadd.f32 0.0, %v125
    %127 = vmatmul.f32.gmra.mxu0 %v37
    %v128 = vpop.f32.mrf.mxu0
    %v129 = vadd.f32 0.0, %v128
    %130 = vmatmul.f32.gmra.mxu0 %v39
    %v131 = vpop.f32.mrf.mxu0
    %v132 = vadd.f32 0.0, %v131
    %133 = vdwg.mxu0
    %134 = vmatpush.msra.mxu0 %v103
    %135 = vmatpush.msra.mxu0 %v101
    %136 = vmatpush.msra.mxu0 %v99
    %137 = vmatpush.msra.mxu0 %v97
    %138 = vmatpush.msra.mxu0 %v95
    %139 = vmatpush.msra.mxu0 %v93
    %140 = vmatpush.msra.mxu0 %v91
    %141 = vmatpush.msra.mxu0 %v89
    %142 = vmatpush.msra.mxu0 %v87
    %143 = vmatpush.msra.mxu0 %v85
    %144 = vmatpush.msra.mxu0 %v83
    %145 = vmatpush.msra.mxu0 %v81
    %146 = vmatpush.msra.mxu0 %v79
    %147 = vmatpush.msra.mxu0 %v77
    %148 = vmatpush.msra.mxu0 %v75
    %149 = vmatpush.msra.mxu0 %v73
    %150 = vmatmul.f32.gmra.mxu0 %v34
    %v151 = vpop.f32.mrf.mxu0
    %v152 = vadd.f32 %v123, %v151
    %153 = vmatmul.f32.gmra.mxu0 %v36
    %v154 = vpop.f32.mrf.mxu0
    %v155 = vadd.f32 %v126, %v154
    %156 = vmatmul.f32.gmra.mxu0 %v38
    %v157 = vpop.f32.mrf.mxu0
    %v158 = vadd.f32 %v129, %v157
    %159 = vmatmul.f32.gmra.mxu0 %v40
    %v160 = vpop.f32.mrf.mxu0
    %v161 = vadd.f32 %v132, %v160
    %162 = vdwg.mxu0
    %163 = vmatpush.msra.mxu0 %v72
    %164 = vmatpush.msra.mxu0 %v70
    %165 = vmatpush.msra.mxu0 %v68
    %166 = vmatpush.msra.mxu0 %v66
    %167 = vmatpush.msra.mxu0 %v64
    %168 = vmatpush.msra.mxu0 %v62
    %169 = vmatpush.msra.mxu0 %v60
    %170 = vmatpush.msra.mxu0 %v58
    %171 = vmatpush.msra.mxu0 %v56
    %172 = vmatpush.msra.mxu0 %v54
    %173 = vmatpush.msra.mxu0 %v52
    %174 = vmatpush.msra.mxu0 %v50
    %175 = vmatpush.msra.mxu0 %v48
    %176 = vmatpush.msra.mxu0 %v46
    %177 = vmatpush.msra.mxu0 %v44
    %178 = vmatpush.msra.mxu0 %v42
    %179 = vmatmul.f32.gmra.mxu0 %v33
    %v180 = vpop.f32.mrf.mxu0
    %v181 = vadd.f32 0.0, %v180
    %182 = vmatmul.f32.gmra.mxu0 %v35
    %v183 = vpop.f32.mrf.mxu0
    %v184 = vadd.f32 0.0, %v183
    %185 = vmatmul.f32.gmra.mxu0 %v37
    %v186 = vpop.f32.mrf.mxu0
    %v187 = vadd.f32 0.0, %v186
    %188 = vmatmul.f32.gmra.mxu0 %v39
    %v189 = vpop.f32.mrf.mxu0
    %v190 = vadd.f32 0.0, %v189
    %191 = vdwg.mxu0
    %192 = vmatpush.msra.mxu0 %v104
    %193 = vmatpush.msra.mxu0 %v102
    %194 = vmatpush.msra.mxu0 %v100
    %195 = vmatpush.msra.mxu0 %v98
    %196 = vmatpush.msra.mxu0 %v96
    %197 = vmatpush.msra.mxu0 %v94
    %198 = vmatpush.msra.mxu0 %v92
    %199 = vmatpush.msra.mxu0 %v90
    %200 = vmatpush.msra.mxu0 %v88
    %201 = vmatpush.msra.mxu0 %v86
    %202 = vmatpush.msra.mxu0 %v84
    %203 = vmatpush.msra.mxu0 %v82
    %204 = vmatpush.msra.mxu0 %v80
    %205 = vmatpush.msra.mxu0 %v78
    %206 = vmatpush.msra.mxu0 %v76
    %207 = vmatpush.msra.mxu0 %v74
    %208 = vmatmul.f32.gmra.mxu0 %v34
    %v209 = vpop.f32.mrf.mxu0
    %v210 = vadd.f32 %v181, %v209
    %211 = vmatmul.f32.gmra.mxu0 %v36
    %v212 = vpop.f32.mrf.mxu0
    %v213 = vadd.f32 %v184, %v212
    %214 = vmatmul.f32.gmra.mxu0 %v38
    %v215 = vpop.f32.mrf.mxu0
    %v216 = vadd.f32 %v187, %v215
    %217 = vmatmul.f32.gmra.mxu0 %v40
    %v218 = vpop.f32.mrf.mxu0
    %v219 = vadd.f32 %v190, %v218
    %220 = vdwg.mxu0
    %v221 = vld [vmem:[%s2] sm:$0xff]
    %v222 = vld [vmem:[%s2 + $0x8] sm:$0xff]
    %v223 = vld [vmem:[%s3] sm:$0xff]
    %v224 = vld [vmem:[%s3 + $0x8] sm:$0xff]
    %vm225 = vcmask 130048
    %v227 = vsel %vm225, %v221, 0
    %v230 = vsel %vm225, %v222, 0
    %232 = vmatpush.msra.mxu0 0.0
    %233 = vmatpush.msra.mxu0 0.0
    %234 = vmatpush.msra.mxu0 0.0
    %235 = vmatpush.msra.mxu0 0.0
    %236 = vmatpush.msra.mxu0 0.0
    %237 = vmatpush.msra.mxu0 0.0
    %238 = vmatpush.msra.mxu0 0.0
    %239 = vmatpush.msra.mxu0 0.0
    %240 = vmatpush.msra.mxu0 0.0
    %241 = vmatpush.msra.mxu0 0.0
    %242 = vmatpush.msra.mxu0 0.0
    %243 = vmatpush.msra.mxu0 0.0
    %244 = vmatpush.msra.mxu0 0.0
    %245 = vmatpush.msra.mxu0 0.0
    %246 = vmatpush.msra.mxu0 %v155
    %247 = vmatpush.msra.mxu0 %v152
    %248 = vmatmul.f32.gmra.mxu0 %v227
    %v249 = vpop.f32.mrf.mxu0
    %v250 = vadd.f32 0.0, %v249
    %251 = vmatmul.f32.gmra.mxu0 %v230
    %v252 = vpop.f32.mrf.mxu0
    %v253 = vadd.f32 0.0, %v252
    %254 = vdwg.mxu0
    %v256 = vsel %vm225, %v223, 0
    %v259 = vsel %vm225, %v224, 0
    %261 = vmatpush.msra.mxu0 0.0
    %262 = vmatpush.msra.mxu0 0.0
    %263 = vmatpush.msra.mxu0 0.0
    %264 = vmatpush.msra.mxu0 0.0
    %265 = vmatpush.msra.mxu0 0.0
    %266 = vmatpush.msra.mxu0 0.0
    %267 = vmatpush.msra.mxu0 0.0
    %268 = vmatpush.msra.mxu0 0.0
    %269 = vmatpush.msra.mxu0 0.0
    %270 = vmatpush.msra.mxu0 0.0
    %271 = vmatpush.msra.mxu0 0.0
    %272 = vmatpush.msra.mxu0 0.0
    %273 = vmatpush.msra.mxu0 0.0
    %274 = vmatpush.msra.mxu0 0.0
    %275 = vmatpush.msra.mxu0 %v213
    %276 = vmatpush.msra.mxu0 %v210
    %277 = vmatmul.f32.gmra.mxu0 %v256
    %v278 = vpop.f32.mrf.mxu0
    %v279 = vadd.f32 0.0, %v278
    %280 = vmatmul.f32.gmra.mxu0 %v259
    %v281 = vpop.f32.mrf.mxu0
    %v282 = vadd.f32 0.0, %v281
    %283 = vdwg.mxu0
    %v284 = vsub.f32 %v250, %v279
    %v285 = vsub.f32 %v253, %v282
    %286 = vst [vmem:[%s4] sm:$0xff] %v284
    %287 = vst [vmem:[%s4 + $0x8] sm:$0xff] %v285
    %288 = vmatpush.msra.mxu0 0.0
    %289 = vmatpush.msra.mxu0 0.0
    %290 = vmatpush.msra.mxu0 0.0
    %291 = vmatpush.msra.mxu0 0.0
    %292 = vmatpush.msra.mxu0 0.0
    %293 = vmatpush.msra.mxu0 0.0
    %294 = vmatpush.msra.mxu0 0.0
    %295 = vmatpush.msra.mxu0 0.0
    %296 = vmatpush.msra.mxu0 0.0
    %297 = vmatpush.msra.mxu0 0.0
    %298 = vmatpush.msra.mxu0 0.0
    %299 = vmatpush.msra.mxu0 0.0
    %300 = vmatpush.msra.mxu0 0.0
    %301 = vmatpush.msra.mxu0 0.0
    %302 = vmatpush.msra.mxu0 %v161
    %303 = vmatpush.msra.mxu0 %v158
    %304 = vmatmul.f32.gmra.mxu0 %v227
    %v305 = vpop.f32.mrf.mxu0
    %v306 = vadd.f32 0.0, %v305
    %307 = vmatmul.f32.gmra.mxu0 %v230
    %v308 = vpop.f32.mrf.mxu0
    %v309 = vadd.f32 0.0, %v308
    %310 = vdwg.mxu0
    %311 = vmatpush.msra.mxu0 0.0
    %312 = vmatpush.msra.mxu0 0.0
    %313 = vmatpush.msra.mxu0 0.0
    %314 = vmatpush.msra.mxu0 0.0
    %315 = vmatpush.msra.mxu0 0.0
    %316 = vmatpush.msra.mxu0 0.0
    %317 = vmatpush.msra.mxu0 0.0
    %318 = vmatpush.msra.mxu0 0.0
    %319 = vmatpush.msra.mxu0 0.0
    %320 = vmatpush.msra.mxu0 0.0
    %321 = vmatpush.msra.mxu0 0.0
    %322 = vmatpush.msra.mxu0 0.0
    %323 = vmatpush.msra.mxu0 0.0
    %324 = vmatpush.msra.mxu0 0.0
    %325 = vmatpush.msra.mxu0 %v219
    %326 = vmatpush.msra.mxu0 %v216
    %327 = vmatmul.f32.gmra.mxu0 %v256
    %v328 = vpop.f32.mrf.mxu0
    %v329 = vadd.f32 0.0, %v328
    %330 = vmatmul.f32.gmra.mxu0 %v259
    %v331 = vpop.f32.mrf.mxu0
    %v332 = vadd.f32 0.0, %v331
    %333 = vdwg.mxu0
    %v334 = vsub.f32 %v306, %v329
    %v335 = vsub.f32 %v309, %v332
    %s336 = scalar_lea.vmem %s4, 16
    %337 = vst [vmem:[%s336] sm:$0xff] %v334
    %338 = vst [vmem:[%s336 + $0x8] sm:$0xff] %v335
    // Predicated region
    $region22: #{irim_fastmri_forward.2} parent=1 // pred_check
      _
    $region23: #{irim_fastmri_forward.2} parent=1 // pred_check_branch
      %340 = sbr.rel (0) target = $region25
    $region24: #{irim_fastmri_forward.2} parent=1 // pred_region
      _
    $region25: #{irim_fastmri_forward.2} parent=1 // pred_fallthru
      _
    // Predicated region
    $region26: #{irim_fastmri_forward.2} parent=1 // pred_check
      _
    $region27: #{irim_fastmri_forward.2} parent=1 // pred_check_branch
      %342 = sbr.rel (0) target = $region29
    $region28: #{irim_fastmri_forward.2} parent=1 // pred_region
      _
    $region29: #{irim_fastmri_forward.2} parent=1 // pred_fallthru
      _
    %343 = vsyncpa [#allocation3], 1

// kernel: irim_fastmri_forward.3
$region0: #{irim_fastmri_forward.3}
  #allocation0 [shape = 'u32[]', space=smem, size = 0x4, offset = 0x4, fixed_abs, tag = 'smem constant byte address 0x4 - core index']
  #allocation1 [shape = 'u32[72,128]{1,0:T(1,128)}', space=vmem, size = 0x9000, scoped, tag = 'internal scratch']
  %s0 = inlined_call_operand.vmem [shape: f32[2,1], index: 0, kind: input, shape index: {}]
  %s1 = inlined_call_operand.vmem [shape: f32[2,1,256], index: 1, kind: input, shape index: {}]
  %s2 = inlined_call_operand.vmem [shape: f32[32,1], index: 2, kind: input, shape index: {}]
  %s3 = inlined_call_operand.vmem [shape: f32[32,1], index: 3, kind: input, shape index: {}]
  %s4 = inlined_call_operand.vmem [shape: f32[2,32], index: 4, kind: input, shape index: {}]
  %s5 = inlined_call_operand.vmem [shape: f32[2,1], index: 5, kind: input, shape index: {}]
  %s6 = inlined_call_operand.vmem [shape: f32[2,1], index: 6, kind: input, shape index: {}]
  %s7 = inlined_call_operand.vmem [shape: f32[2,2,256], index: 7, kind: output, shape index: {}]
  %s8 = sld [smem:[#allocation0]]
  $region65: #{irim_fastmri_forward.3} parent=0
    _
  %s10 = ssub.s32 1, %s8
  %s11 = scalar_select 0, %s10, %s8
  $region1: #{irim_fastmri_forward.3} parent=0
    #allocation2 [shape = 'u8[1024]{0}', space=smem, size = 0x400, scoped, tag = 'input window, operand 0, single buffered']
    #allocation3 [shape = 's32[2]{0}', space=sflag, size = 0x8, scoped, tag = 'scoped memory for irim_fastmri_forward.3']
    %12 = vsyncpa [#allocation3], 0
    loop: start=0, step=1, limit=4
    $region2: #{irim_fastmri_forward.3} parent=1 // loop_pre_header
      _
    $region3: #{irim_fastmri_forward.3} parent=1 // loop_header
      %s14 = sphi 0, %s18
      %p15 = scmp.ge.s32.totalorder %s14, 4
      %s21 = sphi 0, %s33
      %s22 = sphi 0, %s29
      %s23 = sphi 0, %s21
      %s24 = sphi 0, %s22
      %s25 = sphi 0, %s23
      %s26 = sphi 0, %s24
      %s34 = sphi 0, %s34
      %s36 = sphi 0, %s34
      %s37 = sphi 0, %s36
      %s51 = sphi 0, %s37
      %s59 = sphi 0, %s61
      %s62 = sphi 0, %s59
      %s63 = sphi 0, %s62
      %s79 = sphi 0, %s63
      %s83 = sphi 0, %s83
      %s85 = sphi 0, %s83
      %s86 = sphi 0, %s85
      %s100 = sphi 0, %s86
      %s104 = sphi 0, %s104
      %s106 = sphi 0, %s104
      %s107 = sphi 0, %s106
      %s121 = sphi 0, %s107
      %s125 = sphi 0, %s125
      %s127 = sphi 0, %s125
      %s128 = sphi 0, %s127
      %s142 = sphi 0, %s128
      %s146 = sphi 0, %s146
      %s148 = sphi 0, %s146
      %s149 = sphi 0, %s148
      %s163 = sphi 0, %s149
      %s167 = sphi 0, %s167
      %s169 = sphi 0, %s167
      %s170 = sphi 0, %s169
      %s184 = sphi 0, %s170
      %s192 = sphi 0, %s194
      %s195 = sphi 0, %s192
      %s196 = sphi 0, %s195
      %s212 = sphi 0, %s196
    $region4: #{irim_fastmri_forward.3} parent=1 // loop_header_branch
      %17 = sbr.rel (%p15) target = $region8
    $region5: #{irim_fastmri_forward.3} parent=1 // loop_body
      %s19 = ssub.s32 %s14, 1
      %s20 = ssub.s32 %s14, 2
      %s27 = sadd.s32 1, %s22
      %p28 = scmp.ge.s32.totalorder %s27, 1
      %s29 = scalar_select %p28, 0, %s27
      %s30 = sadd.s32 1, %s21
      %s31 = scalar_select %p28, %s30, %s21
      %p32 = scmp.ge.s32.totalorder %s31, 2
      %s33 = scalar_select %p32, 0, %s31
      %s35 = sadd.s32 %s34, 1
      %p38 = scmp.eq.s32.totalorder %s14, 1
      %p39 = scmp.ne.s32.totalorder %s34, %s36
      %p40 = scmp.eq.s32.totalorder %s14, 0
      %p41 = por %p39, %p40
      %p42 = scmp.ne.s32.totalorder %s34, %s36
      %p43 = scmp.eq.s32.totalorder %s19, 1
      %p44 = por %p42, %p43
      %p45 = scmp.ne.s32.totalorder %s36, %s37
      %p46 = scmp.eq.s32.totalorder %s19, 0
      %p47 = por %p45, %p46
      %p48 = scmp.ne.s32.totalorder %s36, %s37
      %p49 = scmp.eq.s32.totalorder %s20, 1
      %p50 = por %p48, %p49
      %p52 = scmp.ne.s32.totalorder %s37, %s51
      %p53 = scmp.eq.s32.totalorder %s20, 0
      %p54 = por %p52, %p53
      %s55 = ssub.s32 %s21, %s33
      %s56 = ssub.s32 %s22, %s29
      %s57 = sor.u32 %s55, %s56
      %p58 = scmp.eq.s32.totalorder %s57, 0
      %s60 = sadd.s32 %s59, 1
      %s61 = scalar_select %p58, %s59, %s60
      %p64 = pneg %p58
      %p65 = scmp.eq.s32.totalorder %s14, 1
      %p66 = por %p64, %p65
      %p67 = scmp.ne.s32.totalorder %s59, %s62
      %p68 = scmp.eq.s32.totalorder %s14, 0
      %p69 = por %p67, %p68
      %p70 = scmp.ne.s32.totalorder %s59, %s62
      %p71 = scmp.eq.s32.totalorder %s19, 1
      %p72 = por %p70, %p71
      %p73 = scmp.ne.s32.totalorder %s62, %s63
      %p74 = scmp.eq.s32.totalorder %s19, 0
      %p75 = por %p73, %p74
      %p76 = scmp.ne.s32.totalorder %s62, %s63
      %p77 = scmp.eq.s32.totalorder %s20, 1
      %p78 = por %p76, %p77
      %p80 = scmp.ne.s32.totalorder %s63, %s79
      %p81 = scmp.eq.s32.totalorder %s20, 0
      %p82 = por %p80, %p81
      %s84 = sadd.s32 %s83, 1
      %p87 = scmp.eq.s32.totalorder %s14, 1
      %p88 = scmp.ne.s32.totalorder %s83, %s85
      %p89 = scmp.eq.s32.totalorder %s14, 0
      %p90 = por %p88, %p89
      %p91 = scmp.ne.s32.totalorder %s83, %s85
      %p92 = scmp.eq.s32.totalorder %s19, 1
      %p93 = por %p91, %p92
      %p94 = scmp.ne.s32.totalorder %s85, %s86
      %p95 = scmp.eq.s32.totalorder %s19, 0
      %p96 = por %p94, %p95
      %p97 = scmp.ne.s32.totalorder %s85, %s86
      %p98 = scmp.eq.s32.totalorder %s20, 1
      %p99 = por %p97, %p98
      %p101 = scmp.ne.s32.totalorder %s86, %s100
      %p102 = scmp.eq.s32.totalorder %s20, 0
      %p103 = por %p101, %p102
      %s105 = sadd.s32 %s104, 1
      %p108 = scmp.eq.s32.totalorder %s14, 1
      %p109 = scmp.ne.s32.totalorder %s104, %s106
      %p110 = scmp.eq.s32.totalorder %s14, 0
      %p111 = por %p109, %p110
      %p112 = scmp.ne.s32.totalorder %s104, %s106
      %p113 = scmp.eq.s32.totalorder %s19, 1
      %p114 = por %p112, %p113
      %p115 = scmp.ne.s32.totalorder %s106, %s107
      %p116 = scmp.eq.s32.totalorder %s19, 0
      %p117 = por %p115, %p116
      %p118 = scmp.ne.s32.totalorder %s106, %s107
      %p119 = scmp.eq.s32.totalorder %s20, 1
      %p120 = por %p118, %p119
      %p122 = scmp.ne.s32.totalorder %s107, %s121
      %p123 = scmp.eq.s32.totalorder %s20, 0
      %p124 = por %p122, %p123
      %s126 = sadd.s32 %s125, 1
      %p129 = scmp.eq.s32.totalorder %s14, 1
      %p130 = scmp.ne.s32.totalorder %s125, %s127
      %p131 = scmp.eq.s32.totalorder %s14, 0
      %p132 = por %p130, %p131
      %p133 = scmp.ne.s32.totalorder %s125, %s127
      %p134 = scmp.eq.s32.totalorder %s19, 1
      %p135 = por %p133, %p134
      %p136 = scmp.ne.s32.totalorder %s127, %s128
      %p137 = scmp.eq.s32.totalorder %s19, 0
      %p138 = por %p136, %p137
      %p139 = scmp.ne.s32.totalorder %s127, %s128
      %p140 = scmp.eq.s32.totalorder %s20, 1
      %p141 = por %p139, %p140
      %p143 = scmp.ne.s32.totalorder %s128, %s142
      %p144 = scmp.eq.s32.totalorder %s20, 0
      %p145 = por %p143, %p144
      %s147 = sadd.s32 %s146, 1
      %p150 = scmp.eq.s32.totalorder %s14, 1
      %p151 = scmp.ne.s32.totalorder %s146, %s148
      %p152 = scmp.eq.s32.totalorder %s14, 0
      %p153 = por %p151, %p152
      %p154 = scmp.ne.s32.totalorder %s146, %s148
      %p155 = scmp.eq.s32.totalorder %s19, 1
      %p156 = por %p154, %p155
      %p157 = scmp.ne.s32.totalorder %s148, %s149
      %p158 = scmp.eq.s32.totalorder %s19, 0
      %p159 = por %p157, %p158
      %p160 = scmp.ne.s32.totalorder %s148, %s149
      %p161 = scmp.eq.s32.totalorder %s20, 1
      %p162 = por %p160, %p161
      %p164 = scmp.ne.s32.totalorder %s149, %s163
      %p165 = scmp.eq.s32.totalorder %s20, 0
      %p166 = por %p164, %p165
      %s168 = sadd.s32 %s167, 1
      %p171 = scmp.eq.s32.totalorder %s14, 1
      %p172 = scmp.ne.s32.totalorder %s167, %s169
      %p173 = scmp.eq.s32.totalorder %s14, 0
      %p174 = por %p172, %p173
      %p175 = scmp.ne.s32.totalorder %s167, %s169
      %p176 = scmp.eq.s32.totalorder %s19, 1
      %p177 = por %p175, %p176
      %p178 = scmp.ne.s32.totalorder %s169, %s170
      %p179 = scmp.eq.s32.totalorder %s19, 0
      %p180 = por %p178, %p179
      %p181 = scmp.ne.s32.totalorder %s169, %s170
      %p182 = scmp.eq.s32.totalorder %s20, 1
      %p183 = por %p181, %p182
      %p185 = scmp.ne.s32.totalorder %s170, %s184
      %p186 = scmp.eq.s32.totalorder %s20, 0
      %p187 = por %p185, %p186
      %s188 = ssub.s32 %s21, %s33
      %s189 = ssub.s32 %s22, %s29
      %s190 = sor.u32 %s188, %s189
      %p191 = scmp.eq.s32.totalorder %s190, 0
      %s193 = sadd.s32 %s192, 1
      %s194 = scalar_select %p191, %s192, %s193
      %p197 = pneg %p191
      %p198 = scmp.eq.s32.totalorder %s14, 1
      %p199 = por %p197, %p198
      %p200 = scmp.ne.s32.totalorder %s192, %s195
      %p201 = scmp.eq.s32.totalorder %s14, 0
      %p202 = por %p200, %p201
      %p203 = scmp.ne.s32.totalorder %s192, %s195
      %p204 = scmp.eq.s32.totalorder %s19, 1
      %p205 = por %p203, %p204
      %p206 = scmp.ne.s32.totalorder %s195, %s196
      %p207 = scmp.eq.s32.totalorder %s19, 0
      %p208 = por %p206, %p207
      %p209 = scmp.ne.s32.totalorder %s195, %s196
      %p210 = scmp.eq.s32.totalorder %s20, 1
      %p211 = por %p209, %p210
      %p213 = scmp.ne.s32.totalorder %s196, %s212
      %p214 = scmp.eq.s32.totalorder %s20, 0
      %p215 = por %p213, %p214
      %p216 = scmp.le.s32.totalorder 1, %s14
      %p217 = scmp.lt.s32.totalorder %s14, 3
      %p218 = pnand %p216, %p217
      %p219 = pneg %p218
      // Predicated region
      $region9: #{irim_fastmri_forward.3} parent=5 // pred_check
        _
      $region10: #{irim_fastmri_forward.3} parent=5 // pred_check_branch
        %221 = sbr.rel (%p218) target = $region12
      $region11: #{irim_fastmri_forward.3} parent=5 // pred_region
        %s222 = ssub.s32 %s14, 1
        // Predicated region
        $region13: #{irim_fastmri_forward.3} parent=11 // pred_check
          %p223 = pneg %p47
        $region14: #{irim_fastmri_forward.3} parent=11 // pred_check_branch
          %225 = sbr.rel (%p223) target = $region16
        $region15: #{irim_fastmri_forward.3} parent=11 // pred_region
          %227 = vsyncadd [#allocation3], 0
          %s229 = sshll.u32 %s0, 4
          %s230 = int_to_ptr.vmem [resolvable:$true] %s229
          %232 = dma.vmem_to_smem %s230, 32, [#allocation2], [#allocation3]
        $region16: #{irim_fastmri_forward.3} parent=11 // pred_fallthru
          _
        // Predicated region
        $region17: #{irim_fastmri_forward.3} parent=11 // pred_check
          %p233 = pneg %p96
        $region18: #{irim_fastmri_forward.3} parent=11 // pred_check_branch
          %235 = sbr.rel (%p233) target = $region20
        $region19: #{irim_fastmri_forward.3} parent=11 // pred_region
          _
        $region20: #{irim_fastmri_forward.3} parent=11 // pred_fallthru
          _
        // Predicated region
        $region21: #{irim_fastmri_forward.3} parent=11 // pred_check
          %p236 = pneg %p117
        $region22: #{irim_fastmri_forward.3} parent=11 // pred_check_branch
          %238 = sbr.rel (%p236) target = $region24
        $region23: #{irim_fastmri_forward.3} parent=11 // pred_region
          _
        $region24: #{irim_fastmri_forward.3} parent=11 // pred_fallthru
          _
        // Predicated region
        $region25: #{irim_fastmri_forward.3} parent=11 // pred_check
          %p239 = pneg %p138
        $region26: #{irim_fastmri_forward.3} parent=11 // pred_check_branch
          %241 = sbr.rel (%p239) target = $region28
        $region27: #{irim_fastmri_forward.3} parent=11 // pred_region
          _
        $region28: #{irim_fastmri_forward.3} parent=11 // pred_fallthru
          _
        // Predicated region
        $region29: #{irim_fastmri_forward.3} parent=11 // pred_check
          %p242 = pneg %p159
        $region30: #{irim_fastmri_forward.3} parent=11 // pred_check_branch
          %244 = sbr.rel (%p242) target = $region32
        $region31: #{irim_fastmri_forward.3} parent=11 // pred_region
          _
        $region32: #{irim_fastmri_forward.3} parent=11 // pred_fallthru
          _
        // Predicated region
        $region33: #{irim_fastmri_forward.3} parent=11 // pred_check
          %p245 = pneg %p180
        $region34: #{irim_fastmri_forward.3} parent=11 // pred_check_branch
          %247 = sbr.rel (%p245) target = $region36
        $region35: #{irim_fastmri_forward.3} parent=11 // pred_region
          _
        $region36: #{irim_fastmri_forward.3} parent=11 // pred_fallthru
          _
      $region12: #{irim_fastmri_forward.3} parent=5 // pred_fallthru
        _
      %p248 = scmp.lt.s32.totalorder %s14, 2
      // Predicated region
      $region37: #{irim_fastmri_forward.3} parent=5 // pred_check
        %p249 = pneg %p248
      $region38: #{irim_fastmri_forward.3} parent=5 // pred_check_branch
        %251 = sbr.rel (%p249) target = $region40
      $region39: #{irim_fastmri_forward.3} parent=5 // pred_region
        // Predicated region
        $region41: #{irim_fastmri_forward.3} parent=39 // pred_check
          %p252 = pneg %p69
        $region42: #{irim_fastmri_forward.3} parent=39 // pred_check_branch
          %254 = sbr.rel (%p252) target = $region44
        $region43: #{irim_fastmri_forward.3} parent=39 // pred_region
          %s255 = smul.u32 2, %s22
          %p256 = scmp.lt.s32.totalorder %s21, 1
          %s257 = scalar_select %p256, %s21, 1
          %p258 = scmp.lt.s32.totalorder %s255, 1
          %s259 = scalar_select %p258, %s255, 1
          %s260 = smul.addr %s257, 2
          %s261 = sadd.s32 %s259, %s260
          %s262 = scalar_lea.vmem %s1, %s261
          %s263 = smul.u32 2, %s22
        $region44: #{irim_fastmri_forward.3} parent=39 // pred_fallthru
          _
      $region40: #{irim_fastmri_forward.3} parent=5 // pred_fallthru
        _
      %p264 = scmp.le.s32.totalorder 1, %s14
      %p265 = scmp.lt.s32.totalorder %s14, 3
      %p266 = pnand %p264, %p265
      %p267 = pneg %p266
      // Predicated region
      $region45: #{irim_fastmri_forward.3} parent=5 // pred_check
        _
      $region46: #{irim_fastmri_forward.3} parent=5 // pred_check_branch
        %269 = sbr.rel (%p266) target = $region48
      $region47: #{irim_fastmri_forward.3} parent=5 // pred_region
        %s270 = ssub.s32 %s14, 1
        // Predicated region
        $region49: #{irim_fastmri_forward.3} parent=47 // pred_check
          %p271 = pneg %p47
        $region50: #{irim_fastmri_forward.3} parent=47 // pred_check_branch
          %273 = sbr.rel (%p271) target = $region52
        $region51: #{irim_fastmri_forward.3} parent=47 // pred_region
          %275 = dma.done [#allocation3], 32
        $region52: #{irim_fastmri_forward.3} parent=47 // pred_fallthru
          _
        %276 = sfence
        %p277 = pneg %p47
        %p278 = pneg %p44
        %s279 = smul.u32 2, %s24
        %p280 = scmp.lt.s32.totalorder %s23, 1
        %s281 = scalar_select %p280, %s23, 1
        %p282 = scmp.lt.s32.totalorder %s279, 1
        %s283 = scalar_select %p282, %s279, 1
        %s284 = smul.addr %s281, 2
        %s285 = sadd.s32 %s283, %s284
        %s286 = scalar_lea.vmem %s1, %s285
        %p287 = pneg %p75
        %p288 = pneg %p72
        %p289 = pneg %p96
        %p290 = pneg %p93
        %p291 = pneg %p117
        %p292 = pneg %p114
        %p293 = pneg %p138
        %p294 = pneg %p135
        %p295 = pneg %p159
        %p296 = pneg %p156
        %p297 = pneg %p180
        %p298 = pneg %p177
        %p299 = pneg %p208
        %p300 = pneg %p205
        %s301 = smul.u32 2, %s24
        %p302 = scmp.lt.s32.totalorder %s23, 1
        %s303 = scalar_select %p302, %s23, 1
        %p304 = scmp.lt.s32.totalorder %s301, 1
        %s305 = scalar_select %p304, %s301, 1
        %s306 = smul.addr %s303, 2
        %s307 = sadd.s32 %s305, %s306
        %s308 = smul.addr %s307, 2
        %s309 = scalar_lea.vmem %s7, %s308
        %s310 = smul.u32 2, %s24
        %p311 = scmp.lt.s32.totalorder %s23, 1
        %s312 = scalar_select %p311, %s23, 1
        %p313 = scmp.lt.s32.totalorder %s310, 1
        %s314 = scalar_select %p313, %s310, 1
        %s315 = smul.addr %s312, 2
        %s316 = sadd.s32 %s314, %s315
        %s317 = scalar_lea.vmem %s1, %s316
        %s318 = smul.u32 2, %s24
        %s319 = smul.u32 2, %s24
        %p320 = scmp.lt.s32.totalorder %s23, 1
        %s321 = scalar_select %p320, %s23, 1
        %p322 = scmp.lt.s32.totalorder %s319, 1
        %s323 = scalar_select %p322, %s319, 1
        %s324 = smul.addr %s321, 2
        %s325 = sadd.s32 %s323, %s324
        %s326 = smul.addr %s325, 2
        %s327 = scalar_lea.vmem %s7, %s326
        %s328 = smul.u32 2, %s24
        %s329 = smul.u32 %s23, 128
        %s330 = sld [smem:[#allocation2 + %s329]]
        %v331 = vstv %s330
        %v332 = vrcp.pop %v331
        %v333 = vmul.f32 %v331, %v332
        %v334 = vsub.f32 1.0, %v333
        %v335 = vmul.f32 %v332, %v334
        %v336 = vadd.f32 %v332, %v335
        %vm337 = vweird.f32 %v331
        %vm338 = vweird.f32 %v332
        %vm339 = vmor %vm337, %vm338
        %v340 = vsel %vm339, %v332, %v336
        %v341 = vand.u32 2147483647, %v331
        %vm342 = vcmp.eq.f32.partialorder %v341, 8.507059e+37
        %v343 = vand.u32 %v331, 2147483648
        %v344 = vor.u32 1.1754944e-38, %v343
        %v345 = vsel %vm342, %v344, %v340
        %s346 = vtos %v345
        %v347 = vld [vmem:[%s317] sm:$0x3]
        %v348 = vstv %s346
        %v349 = vmul.f32 %v347, %v348
        %v350 = vld [vmem:[%s2] sm:$0xff]
        %v351 = vld [vmem:[%s2 + $0x8] sm:$0xff]
        %v352 = vld [vmem:[%s2 + $0x10] sm:$0xff]
        %v353 = vld [vmem:[%s2 + $0x18] sm:$0xff]
        %355 = vset.pattern.permute.xlu0 0
        %356 = vperm.xlu0 %355, %v350
        %v357 = vpop.permute.xlu0 %356
        %360 = vset.pattern.permute.xlu0 0
        %361 = vperm.xlu0 %360, %v351
        %v362 = vpop.permute.xlu0 %361
        %365 = vset.pattern.permute.xlu0 0
        %366 = vperm.xlu0 %365, %v352
        %v367 = vpop.permute.xlu0 %366
        %370 = vset.pattern.permute.xlu0 0
        %371 = vperm.xlu0 %370, %v353
        %v372 = vpop.permute.xlu0 %371
        %v375 = vperm.slane %v349, 0
        %v376 = vperm.slane %v349, 1
        %v379 = vmul.f32 %v357, %v375
        %v380 = vmul.f32 %v357, %v376
        %v381 = vmul.f32 %v362, %v375
        %v382 = vmul.f32 %v362, %v376
        %v383 = vmul.f32 %v367, %v375
        %v384 = vmul.f32 %v367, %v376
        %v385 = vmul.f32 %v372, %v375
        %v386 = vmul.f32 %v372, %v376
        %v387 = vld [vmem:[%s3] sm:$0xff]
        %v388 = vld [vmem:[%s3 + $0x8] sm:$0xff]
        %v389 = vld [vmem:[%s3 + $0x10] sm:$0xff]
        %v390 = vld [vmem:[%s3 + $0x18] sm:$0xff]
        %392 = vset.pattern.permute.xlu0 0
        %393 = vperm.xlu0 %392, %v387
        %v394 = vpop.permute.xlu0 %393
        %397 = vset.pattern.permute.xlu0 0
        %398 = vperm.xlu0 %397, %v388
        %v399 = vpop.permute.xlu0 %398
        %402 = vset.pattern.permute.xlu0 0
        %403 = vperm.xlu0 %402, %v389
        %v404 = vpop.permute.xlu0 %403
        %407 = vset.pattern.permute.xlu0 0
        %408 = vperm.xlu0 %407, %v390
        %v409 = vpop.permute.xlu0 %408
        %v411 = vadd.f32 %v379, %v394
        %v412 = vadd.f32 %v380, %v394
        %v413 = vadd.f32 %v381, %v399
        %v414 = vadd.f32 %v382, %v399
        %v415 = vadd.f32 %v383, %v404
        %v416 = vadd.f32 %v384, %v404
        %v417 = vadd.f32 %v385, %v409
        %v418 = vadd.f32 %v386, %v409
        %v419 = vmax.f32 %v411, 0.0
        %v420 = vmax.f32 %v412, 0.0
        %v421 = vmax.f32 %v413, 0.0
        %v422 = vmax.f32 %v414, 0.0
        %v423 = vmax.f32 %v415, 0.0
        %v424 = vmax.f32 %v416, 0.0
        %v425 = vmax.f32 %v417, 0.0
        %v426 = vmax.f32 %v418, 0.0
        %v427 = vld [vmem:[%s5] sm:$0x3]
        %429 = vset.pattern.permute.xlu0 0
        %430 = vperm.xlu0 %429, %v427
        %v431 = vpop.permute.xlu0 %430
        %v433 = vmul.f32 %v431, %v375
        %v434 = vmul.f32 %v431, %v376
        %v435 = vld [vmem:[%s4] sm:$0x3]
        %vm436 = vcmask 261120
        %v438 = vsel %vm436, %v435, 0
        %440 = vmatpush.msra.mxu0 0.0
        %441 = vmatpush.msra.mxu0 0.0
        %442 = vmatpush.msra.mxu0 0.0
        %443 = vmatpush.msra.mxu0 0.0
        %444 = vmatpush.msra.mxu0 0.0
        %445 = vmatpush.msra.mxu0 0.0
        %446 = vmatpush.msra.mxu0 0.0
        %447 = vmatpush.msra.mxu0 0.0
        %448 = vmatpush.msra.mxu0 0.0
        %449 = vmatpush.msra.mxu0 0.0
        %450 = vmatpush.msra.mxu0 0.0
        %451 = vmatpush.msra.mxu0 0.0
        %452 = vmatpush.msra.mxu0 %v425
        %453 = vmatpush.msra.mxu0 %v423
        %454 = vmatpush.msra.mxu0 %v421
        %455 = vmatpush.msra.mxu0 %v419
        %456 = vmatmul.f32.gmra.mxu0 %v438
        %v457 = vpop.f32.mrf.mxu0
        %v458 = vadd.f32 0.0, %v457
        %459 = vdwg.mxu0
        %460 = vmatpush.msra.mxu0 0.0
        %461 = vmatpush.msra.mxu0 0.0
        %462 = vmatpush.msra.mxu0 0.0
        %463 = vmatpush.msra.mxu0 0.0
        %464 = vmatpush.msra.mxu0 0.0
        %465 = vmatpush.msra.mxu0 0.0
        %466 = vmatpush.msra.mxu0 0.0
        %467 = vmatpush.msra.mxu0 0.0
        %468 = vmatpush.msra.mxu0 0.0
        %469 = vmatpush.msra.mxu0 0.0
        %470 = vmatpush.msra.mxu0 0.0
        %471 = vmatpush.msra.mxu0 0.0
        %472 = vmatpush.msra.mxu0 %v426
        %473 = vmatpush.msra.mxu0 %v424
        %474 = vmatpush.msra.mxu0 %v422
        %475 = vmatpush.msra.mxu0 %v420
        %476 = vmatmul.f32.gmra.mxu0 %v438
        %v477 = vpop.f32.mrf.mxu0
        %v478 = vadd.f32 0.0, %v477
        %479 = vdwg.mxu0
        %v480 = vadd.f32 %v433, %v458
        %v481 = vadd.f32 %v434, %v478
        %v482 = vld [vmem:[%s6] sm:$0x3]
        %484 = vset.pattern.permute.xlu0 0
        %485 = vperm.xlu0 %484, %v482
        %v486 = vpop.permute.xlu0 %485
        %v488 = vadd.f32 %v480, %v486
        %v489 = vadd.f32 %v481, %v486
        %v490 = vstv %s330
        %v491 = vmul.f32 %v488, %v490
        %v492 = vmul.f32 %v489, %v490
        %v495 = vrot.slane %v492, 6
        %vm496 = vcmask 1041408
        %v497 = vsel %vm496, %v491, %v495
        %499 = vst [vmem:[%s327] sm:$0xf] %v497
        %s500 = smul.u32 2, %s24
        %p501 = scmp.lt.s32.totalorder %s23, 1
        %s502 = scalar_select %p501, %s23, 1
        %p503 = scmp.lt.s32.totalorder %s500, 1
        %s504 = scalar_select %p503, %s500, 1
        %s505 = smul.addr %s502, 2
        %s506 = sadd.s32 %s504, %s505
        %s507 = smul.addr %s506, 2
        %s508 = scalar_lea.vmem %s7, %s507
        // Predicated region
        $region53: #{irim_fastmri_forward.3} parent=47 // pred_check
          %p509 = pneg %p205
        $region54: #{irim_fastmri_forward.3} parent=47 // pred_check_branch
          %511 = sbr.rel (%p509) target = $region56
        $region55: #{irim_fastmri_forward.3} parent=47 // pred_region
          %s512 = smul.u32 2, %s24
        $region56: #{irim_fastmri_forward.3} parent=47 // pred_fallthru
          _
      $region48: #{irim_fastmri_forward.3} parent=5 // pred_fallthru
        _
      %p513 = scmp.le.s32.totalorder 2, %s14
      // Predicated region
      $region57: #{irim_fastmri_forward.3} parent=5 // pred_check
        %p514 = pneg %p513
      $region58: #{irim_fastmri_forward.3} parent=5 // pred_check_branch
        %516 = sbr.rel (%p514) target = $region60
      $region59: #{irim_fastmri_forward.3} parent=5 // pred_region
        %s517 = ssub.s32 %s14, 2
        // Predicated region
        $region61: #{irim_fastmri_forward.3} parent=59 // pred_check
          %p518 = pneg %p211
        $region62: #{irim_fastmri_forward.3} parent=59 // pred_check_branch
          %520 = sbr.rel (%p518) target = $region64
        $region63: #{irim_fastmri_forward.3} parent=59 // pred_region
          %s521 = smul.u32 2, %s26
          %p522 = scmp.lt.s32.totalorder %s25, 1
          %s523 = scalar_select %p522, %s25, 1
          %p524 = scmp.lt.s32.totalorder %s521, 1
          %s525 = scalar_select %p524, %s521, 1
          %s526 = smul.addr %s523, 2
          %s527 = sadd.s32 %s525, %s526
          %s528 = smul.addr %s527, 2
          %s529 = scalar_lea.vmem %s7, %s528
        $region64: #{irim_fastmri_forward.3} parent=59 // pred_fallthru
          _
      $region60: #{irim_fastmri_forward.3} parent=5 // pred_fallthru
        _
    $region6: #{irim_fastmri_forward.3} parent=1 // loop_footer
      %s18 = sadd.s32 1, %s14
    $region7: #{irim_fastmri_forward.3} parent=1 // loop_footer_branch
      %13 = sbr.rel target = $region3
    $region8: #{irim_fastmri_forward.3} parent=1 // loop_exit
      _
    %530 = vsyncpa [#allocation3], 1
    %s531 = scalar_lea.sflag [#allocation3], 1
    %532 = vsyncpa %s531, 1

</llo_original>
